<compile_context>
chip_gen: v7x
topology: tpu7x:2x2x1
jax: 0.10.0
libtpu: 0.0.40
codegen_flags: <defaults>
</compile_context>

<pallas_src>
import functools

import numpy as np

import jax
import jax.numpy as jnp
from jax.experimental import pallas as pl
from jax.experimental.pallas import tpu as pltpu

NEG_SLOPE = 0.01   # nn.LeakyReLU default negative_slope
BN_EPS = 1e-5      # nn.BatchNorm2d default eps


def _double_conv_kernel(x_ref, w1_ref, sh1_ref, w2_ref, sh2_ref, m_ref, o_ref,
                        *, width):
    """Fused (conv3x3 'same' + folded BN + LeakyReLU) x 2, batch folded in lanes.

    x_ref:   (Cin,  N*HW)     channel-major, batch+row-flattened input
    w1_ref:  (Cout, 9*Cin)    conv1 weights, tap-major cols, BN1 scale folded
    sh1_ref: (Cout, 1)        folded BN1 shift (includes conv1 bias)
    w2_ref:  (Cout, 9*Cout)   conv2 weights, BN2 scale folded
    sh2_ref: (Cout, 1)        folded BN2 shift (includes conv2 bias)
    m_ref:   (9, 1, N*HW)     per-tap {0,1} masks ('same' padding + batch seams)
    o_ref:   (Cout, N*HW)     output (lane-dense: N*HW on lanes)
    """
    length = x_ref.shape[-1]   # N*HW

    def layer(src, w_ref, sh_ref):
        # src: (C_src, N*HW) f32 value held in vregs.
        pieces = []
        for dy in range(3):
            for dx in range(3):
                t = dy * 3 + dx
                s = (dy - 1) * width + (dx - 1)   # flat spatial offset of tap
                # shifted[:, p] == src[:, p + s]; every wrap-around / cross-seam
                # read lands on a position the halo mask zeroes out.
                shifted = src if s == 0 else pltpu.roll(src, (-s) % length,
                                                        axis=1)
                if not (dy == 1 and dx == 1):     # center tap mask is all-ones
                    shifted = shifted * m_ref[t]
                pieces.append(shifted)
        big = jnp.concatenate(pieces, axis=0)     # (9*C_src, N*HW)
        y = jnp.dot(w_ref[...], big,
                    preferred_element_type=jnp.float32) + sh_ref[...]
        return jnp.where(y > 0, y, NEG_SLOPE * y)  # LeakyReLU

    x = x_ref[...]
    # Conv1 -> BN1 -> Dropout(0.3) [identity in eval] -> LeakyReLU
    y1 = layer(x, w1_ref, sh1_ref)
    # Conv2 -> BN2 -> Dropout(0.4) [identity in eval] -> LeakyReLU
    y2 = layer(y1, w2_ref, sh2_ref)
    o_ref[...] = y2.astype(o_ref.dtype)


@functools.lru_cache(maxsize=None)
def _tap_masks_np(H, W, N):
    """(9, 1, N*H*W) {0,1} masks (numpy, compile-time constant under jit):
    mask[t, 0, n*H*W + y*W + x] == 1 iff tap t of a 'same' 3x3 conv reads a
    real pixel (not the zero halo) at output position (y, x)."""
    y = np.arange(H).reshape(H, 1)
    x = np.arange(W).reshape(1, W)
    masks = []
    for dy in range(3):
        for dx in range(3):
            ok = ((y + dy - 1 >= 0) & (y + dy - 1 < H) &
                  (x + dx - 1 >= 0) & (x + dx - 1 < W))
            masks.append(np.tile(ok.reshape(1, H * W), (1, N)))  # per-batch tile
    return np.stack(masks, axis=0).astype(np.float32)


@jax.jit
def conv_module_forward(x_nchw, w1, sh1, w2, sh2):
    """Pallas implementation of Conv.forward (inference semantics), NCHW in/out."""
    N, Cin, H, W = x_nchw.shape
    Cout = sh1.shape[0]
    HW = H * W
    L = N * HW

    # (N, Cin, H, W) -> (Cin, N*HW): batch folded into the lane axis (tiny op).
    x_flat = jnp.transpose(x_nchw.reshape(N, Cin, HW), (1, 0, 2)).reshape(Cin, L)
    masks = jnp.asarray(_tap_masks_np(H, W, N))   # trace-time constant

    flops = 2 * L * 9 * (Cin * Cout + Cout * Cout)
    bytes_accessed = 4 * (Cin * L + w1.size + w2.size + sh1.size + sh2.size +
                          masks.size + Cout * L)

    out_flat = pl.pallas_call(
        functools.partial(_double_conv_kernel, width=W),
        out_shape=jax.ShapeDtypeStruct((Cout, L), jnp.float32),
        cost_estimate=pl.CostEstimate(flops=flops, transcendentals=0,
                                      bytes_accessed=bytes_accessed),
    )(x_flat, w1, sh1, w2, sh2, masks)

    # (Cout, N*HW) -> (N, Cout, H, W)
    return jnp.transpose(out_flat.reshape(Cout, N, H, W), (1, 0, 2, 3))


def _fold_bn_into_conv(w_oihw, b, gamma, beta, mean, var):
    """Fold conv bias + eval-mode BatchNorm into conv weights and a shift.

    Returns (w_flat, shift): w_flat is (Cout, 9*Cin) with column order
    (tap-major, then input channel) matching the kernel's concat of shifted
    planes; shift is (Cout, 1).
    """
    inv = gamma / jnp.sqrt(var + BN_EPS)                    # (Cout,)
    w_scaled = w_oihw * inv[:, None, None, None]            # (Cout, Cin, 3, 3)
    c_out, c_in = w_oihw.shape[0], w_oihw.shape[1]
    # (o, i, dy, dx) -> (o, dy, dx, i) -> (o, (dy*3+dx)*Cin + i)
    w_flat = jnp.transpose(w_scaled, (0, 2, 3, 1)).reshape(c_out, 9 * c_in)
    shift = (beta + inv * (b - mean)).reshape(c_out, 1)
    return w_flat, shift


def init_params(key, c_in, c_out):
    ks = jax.random.split(key, 12)
    # Conv1 (PyTorch OIHW) + BN1
    w1 = 0.1 * jax.random.normal(ks[0], (c_out, c_in, 3, 3), jnp.float32)
    b1 = 0.1 * jax.random.normal(ks[1], (c_out,), jnp.float32)
    g1 = 1.0 + 0.1 * jax.random.normal(ks[2], (c_out,), jnp.float32)
    be1 = 0.1 * jax.random.normal(ks[3], (c_out,), jnp.float32)
    m1 = 0.1 * jax.random.normal(ks[4], (c_out,), jnp.float32)
    v1 = 1.0 + 0.1 * jnp.abs(jax.random.normal(ks[5], (c_out,), jnp.float32))
    # Conv2 + BN2
    w2 = 0.1 * jax.random.normal(ks[6], (c_out, c_out, 3, 3), jnp.float32)
    b2 = 0.1 * jax.random.normal(ks[7], (c_out,), jnp.float32)
    g2 = 1.0 + 0.1 * jax.random.normal(ks[8], (c_out,), jnp.float32)
    be2 = 0.1 * jax.random.normal(ks[9], (c_out,), jnp.float32)
    m2 = 0.1 * jax.random.normal(ks[10], (c_out,), jnp.float32)
    v2 = 1.0 + 0.1 * jnp.abs(jax.random.normal(ks[11], (c_out,), jnp.float32))

    p = {}
    p["w1"], p["sh1"] = _fold_bn_into_conv(w1, b1, g1, be1, m1, v1)
    p["w2"], p["sh2"] = _fold_bn_into_conv(w2, b2, g2, be2, m2, v2)
    # raw params kept for the pure-JAX reference
    p["raw"] = (w1, b1, g1, be1, m1, v1, w2, b2, g2, be2, m2, v2)
    return p


def reference_forward(x_nchw, params):
    """Pure-JAX reference (NCHW, matches PyTorch eval-mode forward)."""
    w1, b1, g1, be1, m1, v1, w2, b2, g2, be2, m2, v2 = params["raw"]

    def layer(x, w, b, g, be, m, v):
        y = jax.lax.conv_general_dilated(
            x, w, window_strides=(1, 1), padding=((1, 1), (1, 1)),
            dimension_numbers=("NCHW", "OIHW", "NCHW"))
        y = y + b[None, :, None, None]
        y = (g[None, :, None, None] * (y - m[None, :, None, None])
             / jnp.sqrt(v[None, :, None, None] + BN_EPS)
             + be[None, :, None, None])
        return jnp.where(y > 0, y, NEG_SLOPE * y)

    y = layer(x_nchw, w1, b1, g1, be1, m1, v1)
    y = layer(y, w2, b2, g2, be2, m2, v2)
    return y


if __name__ == "__main__":
    key = jax.random.PRNGKey(0)
    k_x, k_p = jax.random.split(key)

    N, C_in, C_out, H, W = 2, 4, 8, 16, 16
    x = jax.random.normal(k_x, (N, C_in, H, W), jnp.float32)   # PyTorch NCHW
    params = init_params(k_p, C_in, C_out)

    out = conv_module_forward(x, params["w1"], params["sh1"],
                              params["w2"], params["sh2"])
    out = jax.block_until_ready(out)

    ref = reference_forward(x, params)
    assert out.shape == (N, C_out, H, W), out.shape
    assert jnp.allclose(out, ref, atol=1e-4, rtol=1e-4), (
        float(jnp.max(jnp.abs(out - ref))))

    print("KERNEL_OK")
</pallas_src>

<mosaic_0001>
module attributes {stable_mosaic.version = 11 : i64} {
  func.func @_double_conv_kernel(%arg0: memref<4x512xf32, #tpu.memory_space<vmem>>, %arg1: memref<8x36xf32, #tpu.memory_space<vmem>>, %arg2: memref<8x1xf32, #tpu.memory_space<vmem>>, %arg3: memref<8x72xf32, #tpu.memory_space<vmem>>, %arg4: memref<8x1xf32, #tpu.memory_space<vmem>>, %arg5: memref<9x1x512xf32, #tpu.memory_space<vmem>>, %arg6: memref<8x512xf32, #tpu.memory_space<vmem>>) attributes {dimension_semantics = [], scalar_prefetch = 0 : i64, scratch_operands = 0 : i64, tpu.core_type = #tpu.core_type<tc>} {
    %c0 = arith.constant 0 : index
    %c0_0 = arith.constant 0 : index
    %0 = vector.load %arg0[%c0, %c0_0] : memref<4x512xf32, #tpu.memory_space<vmem>>, vector<4x512xf32>
    %c17_i32 = arith.constant 17 : i32
    %1 = tpu.dynamic_rotate %0 by %c17_i32 dim 1 : vector<4x512xf32>, i32 -> vector<4x512xf32>
    %c0_1 = arith.constant 0 : index
    %c0_2 = arith.constant 0 : index
    %c0_3 = arith.constant 0 : index
    %2 = vector.load %arg5[%c0_1, %c0_2, %c0_3] : memref<9x1x512xf32, #tpu.memory_space<vmem>>, vector<1x1x512xf32>
    %3 = vector.shape_cast %2 : vector<1x1x512xf32> to vector<1x512xf32>
    %4 = vector.broadcast %3 : vector<1x512xf32> to vector<4x512xf32>
    %5 = arith.mulf %1, %4 : vector<4x512xf32>
    %c16_i32 = arith.constant 16 : i32
    %6 = tpu.dynamic_rotate %0 by %c16_i32 dim 1 : vector<4x512xf32>, i32 -> vector<4x512xf32>
    %c1 = arith.constant 1 : index
    %c0_4 = arith.constant 0 : index
    %c0_5 = arith.constant 0 : index
    %7 = vector.load %arg5[%c1, %c0_4, %c0_5] : memref<9x1x512xf32, #tpu.memory_space<vmem>>, vector<1x1x512xf32>
    %8 = vector.shape_cast %7 : vector<1x1x512xf32> to vector<1x512xf32>
    %9 = vector.broadcast %8 : vector<1x512xf32> to vector<4x512xf32>
    %10 = arith.mulf %6, %9 : vector<4x512xf32>
    %c15_i32 = arith.constant 15 : i32
    %11 = tpu.dynamic_rotate %0 by %c15_i32 dim 1 : vector<4x512xf32>, i32 -> vector<4x512xf32>
    %c2 = arith.constant 2 : index
    %c0_6 = arith.constant 0 : index
    %c0_7 = arith.constant 0 : index
    %12 = vector.load %arg5[%c2, %c0_6, %c0_7] : memref<9x1x512xf32, #tpu.memory_space<vmem>>, vector<1x1x512xf32>
    %13 = vector.shape_cast %12 : vector<1x1x512xf32> to vector<1x512xf32>
    %14 = vector.broadcast %13 : vector<1x512xf32> to vector<4x512xf32>
    %15 = arith.mulf %11, %14 : vector<4x512xf32>
    %c1_i32 = arith.constant 1 : i32
    %16 = tpu.dynamic_rotate %0 by %c1_i32 dim 1 : vector<4x512xf32>, i32 -> vector<4x512xf32>
    %c3 = arith.constant 3 : index
    %c0_8 = arith.constant 0 : index
    %c0_9 = arith.constant 0 : index
    %17 = vector.load %arg5[%c3, %c0_8, %c0_9] : memref<9x1x512xf32, #tpu.memory_space<vmem>>, vector<1x1x512xf32>
    %18 = vector.shape_cast %17 : vector<1x1x512xf32> to vector<1x512xf32>
    %19 = vector.broadcast %18 : vector<1x512xf32> to vector<4x512xf32>
    %20 = arith.mulf %16, %19 : vector<4x512xf32>
    %c511_i32 = arith.constant 511 : i32
    %21 = tpu.dynamic_rotate %0 by %c511_i32 dim 1 : vector<4x512xf32>, i32 -> vector<4x512xf32>
    %c5 = arith.constant 5 : index
    %c0_10 = arith.constant 0 : index
    %c0_11 = arith.constant 0 : index
    %22 = vector.load %arg5[%c5, %c0_10, %c0_11] : memref<9x1x512xf32, #tpu.memory_space<vmem>>, vector<1x1x512xf32>
    %23 = vector.shape_cast %22 : vector<1x1x512xf32> to vector<1x512xf32>
    %24 = vector.broadcast %23 : vector<1x512xf32> to vector<4x512xf32>
    %25 = arith.mulf %21, %24 : vector<4x512xf32>
    %c497_i32 = arith.constant 497 : i32
    %26 = tpu.dynamic_rotate %0 by %c497_i32 dim 1 : vector<4x512xf32>, i32 -> vector<4x512xf32>
    %c6 = arith.constant 6 : index
    %c0_12 = arith.constant 0 : index
    %c0_13 = arith.constant 0 : index
    %27 = vector.load %arg5[%c6, %c0_12, %c0_13] : memref<9x1x512xf32, #tpu.memory_space<vmem>>, vector<1x1x512xf32>
    %28 = vector.shape_cast %27 : vector<1x1x512xf32> to vector<1x512xf32>
    %29 = vector.broadcast %28 : vector<1x512xf32> to vector<4x512xf32>
    %30 = arith.mulf %26, %29 : vector<4x512xf32>
    %c496_i32 = arith.constant 496 : i32
    %31 = tpu.dynamic_rotate %0 by %c496_i32 dim 1 : vector<4x512xf32>, i32 -> vector<4x512xf32>
    %c7 = arith.constant 7 : index
    %c0_14 = arith.constant 0 : index
    %c0_15 = arith.constant 0 : index
    %32 = vector.load %arg5[%c7, %c0_14, %c0_15] : memref<9x1x512xf32, #tpu.memory_space<vmem>>, vector<1x1x512xf32>
    %33 = vector.shape_cast %32 : vector<1x1x512xf32> to vector<1x512xf32>
    %34 = vector.broadcast %33 : vector<1x512xf32> to vector<4x512xf32>
    %35 = arith.mulf %31, %34 : vector<4x512xf32>
    %c495_i32 = arith.constant 495 : i32
    %36 = tpu.dynamic_rotate %0 by %c495_i32 dim 1 : vector<4x512xf32>, i32 -> vector<4x512xf32>
    %c8 = arith.constant 8 : index
    %c0_16 = arith.constant 0 : index
    %c0_17 = arith.constant 0 : index
    %37 = vector.load %arg5[%c8, %c0_16, %c0_17] : memref<9x1x512xf32, #tpu.memory_space<vmem>>, vector<1x1x512xf32>
    %38 = vector.shape_cast %37 : vector<1x1x512xf32> to vector<1x512xf32>
    %39 = vector.broadcast %38 : vector<1x512xf32> to vector<4x512xf32>
    %40 = arith.mulf %36, %39 : vector<4x512xf32>
    %41 = tpu.concatenate %5, %10, %15, %20, %0, %25, %30, %35, %40 in 0 : vector<4x512xf32>, vector<4x512xf32>, vector<4x512xf32>, vector<4x512xf32>, vector<4x512xf32>, vector<4x512xf32>, vector<4x512xf32>, vector<4x512xf32>, vector<4x512xf32> -> vector<36x512xf32>
    %c0_18 = arith.constant 0 : index
    %c0_19 = arith.constant 0 : index
    %42 = vector.load %arg1[%c0_18, %c0_19] : memref<8x36xf32, #tpu.memory_space<vmem>>, vector<8x36xf32>
    %cst = arith.constant dense<0.000000e+00> : vector<8x512xf32>
    %43 = tpu.matmul %42, %41, %cst {dimension_numbers = #tpu.dot_dimension_numbers<[1], [0], [0], [1], [0, 0, 1, 1], [], []>} : vector<8x36xf32>, vector<36x512xf32>, vector<8x512xf32> -> vector<8x512xf32>
    %c0_20 = arith.constant 0 : index
    %c0_21 = arith.constant 0 : index
    %44 = vector.load %arg2[%c0_20, %c0_21] : memref<8x1xf32, #tpu.memory_space<vmem>>, vector<8x1xf32>
    %45 = vector.broadcast %44 : vector<8x1xf32> to vector<8x512xf32>
    %46 = arith.addf %43, %45 : vector<8x512xf32>
    %cst_22 = arith.constant 0.000000e+00 : f32
    %47 = vector.broadcast %cst_22 : f32 to vector<8x512xf32>
    %48 = arith.cmpf ogt, %46, %47 : vector<8x512xf32>
    %cst_23 = arith.constant 0.00999999977 : f32
    %49 = vector.broadcast %cst_23 : f32 to vector<8x512xf32>
    %50 = arith.mulf %49, %46 : vector<8x512xf32>
    %51 = arith.select %48, %46, %50 : vector<8x512xi1>, vector<8x512xf32>
    %c17_i32_24 = arith.constant 17 : i32
    %52 = tpu.dynamic_rotate %51 by %c17_i32_24 dim 1 : vector<8x512xf32>, i32 -> vector<8x512xf32>
    %c0_25 = arith.constant 0 : index
    %c0_26 = arith.constant 0 : index
    %c0_27 = arith.constant 0 : index
    %53 = vector.load %arg5[%c0_25, %c0_26, %c0_27] : memref<9x1x512xf32, #tpu.memory_space<vmem>>, vector<1x1x512xf32>
    %54 = vector.shape_cast %53 : vector<1x1x512xf32> to vector<1x512xf32>
    %55 = vector.broadcast %54 : vector<1x512xf32> to vector<8x512xf32>
    %56 = arith.mulf %52, %55 : vector<8x512xf32>
    %c16_i32_28 = arith.constant 16 : i32
    %57 = tpu.dynamic_rotate %51 by %c16_i32_28 dim 1 : vector<8x512xf32>, i32 -> vector<8x512xf32>
    %c1_29 = arith.constant 1 : index
    %c0_30 = arith.constant 0 : index
    %c0_31 = arith.constant 0 : index
    %58 = vector.load %arg5[%c1_29, %c0_30, %c0_31] : memref<9x1x512xf32, #tpu.memory_space<vmem>>, vector<1x1x512xf32>
    %59 = vector.shape_cast %58 : vector<1x1x512xf32> to vector<1x512xf32>
    %60 = vector.broadcast %59 : vector<1x512xf32> to vector<8x512xf32>
    %61 = arith.mulf %57, %60 : vector<8x512xf32>
    %c15_i32_32 = arith.constant 15 : i32
    %62 = tpu.dynamic_rotate %51 by %c15_i32_32 dim 1 : vector<8x512xf32>, i32 -> vector<8x512xf32>
    %c2_33 = arith.constant 2 : index
    %c0_34 = arith.constant 0 : index
    %c0_35 = arith.constant 0 : index
    %63 = vector.load %arg5[%c2_33, %c0_34, %c0_35] : memref<9x1x512xf32, #tpu.memory_space<vmem>>, vector<1x1x512xf32>
    %64 = vector.shape_cast %63 : vector<1x1x512xf32> to vector<1x512xf32>
    %65 = vector.broadcast %64 : vector<1x512xf32> to vector<8x512xf32>
    %66 = arith.mulf %62, %65 : vector<8x512xf32>
    %c1_i32_36 = arith.constant 1 : i32
    %67 = tpu.dynamic_rotate %51 by %c1_i32_36 dim 1 : vector<8x512xf32>, i32 -> vector<8x512xf32>
    %c3_37 = arith.constant 3 : index
    %c0_38 = arith.constant 0 : index
    %c0_39 = arith.constant 0 : index
    %68 = vector.load %arg5[%c3_37, %c0_38, %c0_39] : memref<9x1x512xf32, #tpu.memory_space<vmem>>, vector<1x1x512xf32>
    %69 = vector.shape_cast %68 : vector<1x1x512xf32> to vector<1x512xf32>
    %70 = vector.broadcast %69 : vector<1x512xf32> to vector<8x512xf32>
    %71 = arith.mulf %67, %70 : vector<8x512xf32>
    %c511_i32_40 = arith.constant 511 : i32
    %72 = tpu.dynamic_rotate %51 by %c511_i32_40 dim 1 : vector<8x512xf32>, i32 -> vector<8x512xf32>
    %c5_41 = arith.constant 5 : index
    %c0_42 = arith.constant 0 : index
    %c0_43 = arith.constant 0 : index
    %73 = vector.load %arg5[%c5_41, %c0_42, %c0_43] : memref<9x1x512xf32, #tpu.memory_space<vmem>>, vector<1x1x512xf32>
    %74 = vector.shape_cast %73 : vector<1x1x512xf32> to vector<1x512xf32>
    %75 = vector.broadcast %74 : vector<1x512xf32> to vector<8x512xf32>
    %76 = arith.mulf %72, %75 : vector<8x512xf32>
    %c497_i32_44 = arith.constant 497 : i32
    %77 = tpu.dynamic_rotate %51 by %c497_i32_44 dim 1 : vector<8x512xf32>, i32 -> vector<8x512xf32>
    %c6_45 = arith.constant 6 : index
    %c0_46 = arith.constant 0 : index
    %c0_47 = arith.constant 0 : index
    %78 = vector.load %arg5[%c6_45, %c0_46, %c0_47] : memref<9x1x512xf32, #tpu.memory_space<vmem>>, vector<1x1x512xf32>
    %79 = vector.shape_cast %78 : vector<1x1x512xf32> to vector<1x512xf32>
    %80 = vector.broadcast %79 : vector<1x512xf32> to vector<8x512xf32>
    %81 = arith.mulf %77, %80 : vector<8x512xf32>
    %c496_i32_48 = arith.constant 496 : i32
    %82 = tpu.dynamic_rotate %51 by %c496_i32_48 dim 1 : vector<8x512xf32>, i32 -> vector<8x512xf32>
    %c7_49 = arith.constant 7 : index
    %c0_50 = arith.constant 0 : index
    %c0_51 = arith.constant 0 : index
    %83 = vector.load %arg5[%c7_49, %c0_50, %c0_51] : memref<9x1x512xf32, #tpu.memory_space<vmem>>, vector<1x1x512xf32>
    %84 = vector.shape_cast %83 : vector<1x1x512xf32> to vector<1x512xf32>
    %85 = vector.broadcast %84 : vector<1x512xf32> to vector<8x512xf32>
    %86 = arith.mulf %82, %85 : vector<8x512xf32>
    %c495_i32_52 = arith.constant 495 : i32
    %87 = tpu.dynamic_rotate %51 by %c495_i32_52 dim 1 : vector<8x512xf32>, i32 -> vector<8x512xf32>
    %c8_53 = arith.constant 8 : index
    %c0_54 = arith.constant 0 : index
    %c0_55 = arith.constant 0 : index
    %88 = vector.load %arg5[%c8_53, %c0_54, %c0_55] : memref<9x1x512xf32, #tpu.memory_space<vmem>>, vector<1x1x512xf32>
    %89 = vector.shape_cast %88 : vector<1x1x512xf32> to vector<1x512xf32>
    %90 = vector.broadcast %89 : vector<1x512xf32> to vector<8x512xf32>
    %91 = arith.mulf %87, %90 : vector<8x512xf32>
    %92 = tpu.concatenate %56, %61, %66, %71, %51, %76, %81, %86, %91 in 0 : vector<8x512xf32>, vector<8x512xf32>, vector<8x512xf32>, vector<8x512xf32>, vector<8x512xf32>, vector<8x512xf32>, vector<8x512xf32>, vector<8x512xf32>, vector<8x512xf32> -> vector<72x512xf32>
    %c0_56 = arith.constant 0 : index
    %c0_57 = arith.constant 0 : index
    %93 = vector.load %arg3[%c0_56, %c0_57] : memref<8x72xf32, #tpu.memory_space<vmem>>, vector<8x72xf32>
    %cst_58 = arith.constant dense<0.000000e+00> : vector<8x512xf32>
    %94 = tpu.matmul %93, %92, %cst_58 {dimension_numbers = #tpu.dot_dimension_numbers<[1], [0], [0], [1], [0, 0, 1, 1], [], []>} : vector<8x72xf32>, vector<72x512xf32>, vector<8x512xf32> -> vector<8x512xf32>
    %c0_59 = arith.constant 0 : index
    %c0_60 = arith.constant 0 : index
    %95 = vector.load %arg4[%c0_59, %c0_60] : memref<8x1xf32, #tpu.memory_space<vmem>>, vector<8x1xf32>
    %96 = vector.broadcast %95 : vector<8x1xf32> to vector<8x512xf32>
    %97 = arith.addf %94, %96 : vector<8x512xf32>
    %cst_61 = arith.constant 0.000000e+00 : f32
    %98 = vector.broadcast %cst_61 : f32 to vector<8x512xf32>
    %99 = arith.cmpf ogt, %97, %98 : vector<8x512xf32>
    %cst_62 = arith.constant 0.00999999977 : f32
    %100 = vector.broadcast %cst_62 : f32 to vector<8x512xf32>
    %101 = arith.mulf %100, %97 : vector<8x512xf32>
    %102 = arith.select %99, %97, %101 : vector<8x512xi1>, vector<8x512xf32>
    %c0_63 = arith.constant 0 : index
    %c0_64 = arith.constant 0 : index
    %103 = vector.load %arg6[%c0_63, %c0_64] : memref<8x512xf32, #tpu.memory_space<vmem>>, vector<8x512xf32>
    tpu.vector_store %arg6[%c0_63, %c0_64], %102 {strides = array<i32>} : memref<8x512xf32, #tpu.memory_space<vmem>>, vector<8x512xf32>,
    return
  }
}

</mosaic_0001>

<llo_original>
// kernel: conv_module_forward.1
$region0: #{conv_module_forward.1}
  #allocation0 [shape = 'u32[]', space=smem, size = 0x4, offset = 0x4, fixed_abs, tag = 'smem constant byte address 0x4 - core index']
  #allocation1 [shape = 'u32[144,128]{1,0:T(1,128)}', space=vmem, size = 0x12000, scoped, tag = 'internal scratch']
  %s0 = inlined_call_operand.vmem [shape: f32[4,512], index: 0, kind: input, shape index: {}]
  %s1 = inlined_call_operand.vmem [shape: f32[8,36], index: 1, kind: input, shape index: {}]
  %s2 = inlined_call_operand.vmem [shape: f32[8,1], index: 2, kind: input, shape index: {}]
  %s3 = inlined_call_operand.vmem [shape: f32[8,72], index: 3, kind: input, shape index: {}]
  %s4 = inlined_call_operand.vmem [shape: f32[8,1], index: 4, kind: input, shape index: {}]
  %s5 = inlined_call_operand.vmem [shape: f32[9,1,512], index: 5, kind: input, shape index: {}]
  %s6 = inlined_call_operand.vmem [shape: f32[8,512], index: 6, kind: output, shape index: {}]
  %s7 = sld [smem:[#allocation0]]
  $region34: #{conv_module_forward.1} parent=0
    _
  %s9 = ssub.s32 1, %s7
  %s10 = scalar_select 0, %s9, %s7
  // Predicated region
  $region2: #{conv_module_forward.1} parent=0 // pred_check
    _
  $region3: #{conv_module_forward.1} parent=0 // pred_check_branch
    %12 = sbr.rel (0) target = $region5
  $region4: #{conv_module_forward.1} parent=0 // pred_region
    _
  $region5: #{conv_module_forward.1} parent=0 // pred_fallthru
    _
  // Predicated region
  $region6: #{conv_module_forward.1} parent=0 // pred_check
    _
  $region7: #{conv_module_forward.1} parent=0 // pred_check_branch
    %14 = sbr.rel (0) target = $region9
  $region8: #{conv_module_forward.1} parent=0 // pred_region
    _
  $region9: #{conv_module_forward.1} parent=0 // pred_fallthru
    _
  // Predicated region
  $region10: #{conv_module_forward.1} parent=0 // pred_check
    _
  $region11: #{conv_module_forward.1} parent=0 // pred_check_branch
    %16 = sbr.rel (0) target = $region13
  $region12: #{conv_module_forward.1} parent=0 // pred_region
    _
  $region13: #{conv_module_forward.1} parent=0 // pred_fallthru
    _
  // Predicated region
  $region14: #{conv_module_forward.1} parent=0 // pred_check
    _
  $region15: #{conv_module_forward.1} parent=0 // pred_check_branch
    %18 = sbr.rel (0) target = $region17
  $region16: #{conv_module_forward.1} parent=0 // pred_region
    _
  $region17: #{conv_module_forward.1} parent=0 // pred_fallthru
    _
  // Predicated region
  $region18: #{conv_module_forward.1} parent=0 // pred_check
    _
  $region19: #{conv_module_forward.1} parent=0 // pred_check_branch
    %20 = sbr.rel (0) target = $region21
  $region20: #{conv_module_forward.1} parent=0 // pred_region
    _
  $region21: #{conv_module_forward.1} parent=0 // pred_fallthru
    _
  // Predicated region
  $region22: #{conv_module_forward.1} parent=0 // pred_check
    _
  $region23: #{conv_module_forward.1} parent=0 // pred_check_branch
    %22 = sbr.rel (0) target = $region25
  $region24: #{conv_module_forward.1} parent=0 // pred_region
    _
  $region25: #{conv_module_forward.1} parent=0 // pred_fallthru
    _
  %v23 = vld [vmem:[%s0] sm:$0xff]
  %v24 = vld [vmem:[%s0 + $0x8] sm:$0xff]
  %v27 = vcombine.high %v23, %v23
  %v28 = vcombine.high %v24, %v24
  %31 = vrot.lane.b32.xlu0 %v23, 17
  %v32 = vpop.permute.xlu0 %31
  %33 = vrot.lane.b32.xlu0 %v27, 17
  %v34 = vpop.permute.xlu0 %33
  %35 = vrot.lane.b32.xlu0 %v24, 17
  %v36 = vpop.permute.xlu0 %35
  %37 = vrot.lane.b32.xlu0 %v28, 17
  %v38 = vpop.permute.xlu0 %37
  %v39 = vlaneseq
  %v40 = vand.u32 %v39, 127
  %vm41 = vcmp.lt.s32.totalorder %v40, 17
  %v42 = vsel %vm41, %v36, %v38
  %v43 = vsel %vm41, %v34, %v36
  %v44 = vsel %vm41, %v32, %v34
  %v45 = vsel %vm41, %v38, %v32
  %v46 = vld [vmem:[%s5] sm:$0xf]
  %v48 = vlaneseq
  %v49 = vshrl.u32 %v48, 7
  %v50 = vsub.s32 0, %v49
  %v51 = vrot.slane %v46, %v50
  %v52 = vlaneseq
  %v53 = vshrl.u32 %v52, 7
  %v54 = vsub.s32 1, %v53
  %v55 = vrot.slane %v46, %v54
  %v56 = vlaneseq
  %v57 = vshrl.u32 %v56, 7
  %v58 = vsub.s32 2, %v57
  %v59 = vrot.slane %v46, %v58
  %v60 = vlaneseq
  %v61 = vshrl.u32 %v60, 7
  %v62 = vsub.s32 3, %v61
  %v63 = vrot.slane %v46, %v62
  %v68 = vmul.f32 %v45, %v51
  %v69 = vmul.f32 %v44, %v55
  %v70 = vmul.f32 %v43, %v59
  %v71 = vmul.f32 %v42, %v63
  %72 = vrot.lane.b32.xlu0 %v23, 16
  %v73 = vpop.permute.xlu0 %72
  %74 = vrot.lane.b32.xlu0 %v27, 16
  %v75 = vpop.permute.xlu0 %74
  %76 = vrot.lane.b32.xlu0 %v24, 16
  %v77 = vpop.permute.xlu0 %76
  %78 = vrot.lane.b32.xlu0 %v28, 16
  %v79 = vpop.permute.xlu0 %78
  %vm80 = vcmp.lt.s32.totalorder %v40, 16
  %v81 = vsel %vm80, %v77, %v79
  %v82 = vsel %vm80, %v75, %v77
  %v83 = vsel %vm80, %v73, %v75
  %v84 = vsel %vm80, %v79, %v73
  %s85 = scalar_lea.vmem %s5, 4
  %v86 = vld [vmem:[%s85] sm:$0xf]
  %v88 = vlaneseq
  %v89 = vshrl.u32 %v88, 7
  %v90 = vsub.s32 0, %v89
  %v91 = vrot.slane %v86, %v90
  %v92 = vlaneseq
  %v93 = vshrl.u32 %v92, 7
  %v94 = vsub.s32 1, %v93
  %v95 = vrot.slane %v86, %v94
  %v96 = vlaneseq
  %v97 = vshrl.u32 %v96, 7
  %v98 = vsub.s32 2, %v97
  %v99 = vrot.slane %v86, %v98
  %v100 = vlaneseq
  %v101 = vshrl.u32 %v100, 7
  %v102 = vsub.s32 3, %v101
  %v103 = vrot.slane %v86, %v102
  %v108 = vmul.f32 %v84, %v91
  %v109 = vmul.f32 %v83, %v95
  %v110 = vmul.f32 %v82, %v99
  %v111 = vmul.f32 %v81, %v103
  %112 = vrot.lane.b32.xlu0 %v23, 15
  %v113 = vpop.permute.xlu0 %112
  %114 = vrot.lane.b32.xlu0 %v27, 15
  %v115 = vpop.permute.xlu0 %114
  %116 = vrot.lane.b32.xlu0 %v24, 15
  %v117 = vpop.permute.xlu0 %116
  %118 = vrot.lane.b32.xlu0 %v28, 15
  %v119 = vpop.permute.xlu0 %118
  %vm120 = vcmp.lt.s32.totalorder %v40, 15
  %v121 = vsel %vm120, %v117, %v119
  %v122 = vsel %vm120, %v115, %v117
  %v123 = vsel %vm120, %v113, %v115
  %v124 = vsel %vm120, %v119, %v113
  %s125 = scalar_lea.vmem %s5, 8
  %v126 = vld [vmem:[%s125] sm:$0xf]
  %v128 = vlaneseq
  %v129 = vshrl.u32 %v128, 7
  %v130 = vsub.s32 0, %v129
  %v131 = vrot.slane %v126, %v130
  %v132 = vlaneseq
  %v133 = vshrl.u32 %v132, 7
  %v134 = vsub.s32 1, %v133
  %v135 = vrot.slane %v126, %v134
  %v136 = vlaneseq
  %v137 = vshrl.u32 %v136, 7
  %v138 = vsub.s32 2, %v137
  %v139 = vrot.slane %v126, %v138
  %v140 = vlaneseq
  %v141 = vshrl.u32 %v140, 7
  %v142 = vsub.s32 3, %v141
  %v143 = vrot.slane %v126, %v142
  %v148 = vmul.f32 %v124, %v131
  %v149 = vmul.f32 %v123, %v135
  %v150 = vmul.f32 %v122, %v139
  %v151 = vmul.f32 %v121, %v143
  %152 = vrot.lane.b32.xlu0 %v23, 1
  %v153 = vpop.permute.xlu0 %152
  %154 = vrot.lane.b32.xlu0 %v27, 1
  %v155 = vpop.permute.xlu0 %154
  %156 = vrot.lane.b32.xlu0 %v24, 1
  %v157 = vpop.permute.xlu0 %156
  %158 = vrot.lane.b32.xlu0 %v28, 1
  %v159 = vpop.permute.xlu0 %158
  %vm160 = vcmp.lt.s32.totalorder %v40, 1
  %v161 = vsel %vm160, %v157, %v159
  %v162 = vsel %vm160, %v155, %v157
  %v163 = vsel %vm160, %v153, %v155
  %v164 = vsel %vm160, %v159, %v153
  %s165 = scalar_lea.vmem %s5, 12
  %v166 = vld [vmem:[%s165] sm:$0xf]
  %v168 = vlaneseq
  %v169 = vshrl.u32 %v168, 7
  %v170 = vsub.s32 0, %v169
  %v171 = vrot.slane %v166, %v170
  %v172 = vlaneseq
  %v173 = vshrl.u32 %v172, 7
  %v174 = vsub.s32 1, %v173
  %v175 = vrot.slane %v166, %v174
  %v176 = vlaneseq
  %v177 = vshrl.u32 %v176, 7
  %v178 = vsub.s32 2, %v177
  %v179 = vrot.slane %v166, %v178
  %v180 = vlaneseq
  %v181 = vshrl.u32 %v180, 7
  %v182 = vsub.s32 3, %v181
  %v183 = vrot.slane %v166, %v182
  %v188 = vmul.f32 %v164, %v171
  %v189 = vmul.f32 %v163, %v175
  %v190 = vmul.f32 %v162, %v179
  %v191 = vmul.f32 %v161, %v183
  %192 = vrot.lane.b32.xlu0 %v23, 127
  %v193 = vpop.permute.xlu0 %192
  %194 = vrot.lane.b32.xlu0 %v27, 127
  %v195 = vpop.permute.xlu0 %194
  %196 = vrot.lane.b32.xlu0 %v24, 127
  %v197 = vpop.permute.xlu0 %196
  %198 = vrot.lane.b32.xlu0 %v28, 127
  %v199 = vpop.permute.xlu0 %198
  %vm200 = vcmp.lt.s32.totalorder %v40, 127
  %v201 = vsel %vm200, %v197, %v199
  %v202 = vsel %vm200, %v195, %v197
  %v203 = vsel %vm200, %v193, %v195
  %v204 = vsel %vm200, %v199, %v193
  %s205 = scalar_lea.vmem %s5, 20
  %v206 = vld [vmem:[%s205] sm:$0xf]
  %v208 = vlaneseq
  %v209 = vshrl.u32 %v208, 7
  %v210 = vsub.s32 0, %v209
  %v211 = vrot.slane %v206, %v210
  %v212 = vlaneseq
  %v213 = vshrl.u32 %v212, 7
  %v214 = vsub.s32 1, %v213
  %v215 = vrot.slane %v206, %v214
  %v216 = vlaneseq
  %v217 = vshrl.u32 %v216, 7
  %v218 = vsub.s32 2, %v217
  %v219 = vrot.slane %v206, %v218
  %v220 = vlaneseq
  %v221 = vshrl.u32 %v220, 7
  %v222 = vsub.s32 3, %v221
  %v223 = vrot.slane %v206, %v222
  %v228 = vmul.f32 %v203, %v211
  %v229 = vmul.f32 %v202, %v215
  %v230 = vmul.f32 %v201, %v219
  %v231 = vmul.f32 %v204, %v223
  %232 = vrot.lane.b32.xlu0 %v23, 113
  %v233 = vpop.permute.xlu0 %232
  %234 = vrot.lane.b32.xlu0 %v27, 113
  %v235 = vpop.permute.xlu0 %234
  %236 = vrot.lane.b32.xlu0 %v24, 113
  %v237 = vpop.permute.xlu0 %236
  %238 = vrot.lane.b32.xlu0 %v28, 113
  %v239 = vpop.permute.xlu0 %238
  %vm240 = vcmp.lt.s32.totalorder %v40, 113
  %v241 = vsel %vm240, %v237, %v239
  %v242 = vsel %vm240, %v235, %v237
  %v243 = vsel %vm240, %v233, %v235
  %v244 = vsel %vm240, %v239, %v233
  %s245 = scalar_lea.vmem %s5, 24
  %v246 = vld [vmem:[%s245] sm:$0xf]
  %v248 = vlaneseq
  %v249 = vshrl.u32 %v248, 7
  %v250 = vsub.s32 0, %v249
  %v251 = vrot.slane %v246, %v250
  %v252 = vlaneseq
  %v253 = vshrl.u32 %v252, 7
  %v254 = vsub.s32 1, %v253
  %v255 = vrot.slane %v246, %v254
  %v256 = vlaneseq
  %v257 = vshrl.u32 %v256, 7
  %v258 = vsub.s32 2, %v257
  %v259 = vrot.slane %v246, %v258
  %v260 = vlaneseq
  %v261 = vshrl.u32 %v260, 7
  %v262 = vsub.s32 3, %v261
  %v263 = vrot.slane %v246, %v262
  %v268 = vmul.f32 %v243, %v251
  %v269 = vmul.f32 %v242, %v255
  %v270 = vmul.f32 %v241, %v259
  %v271 = vmul.f32 %v244, %v263
  %272 = vrot.lane.b32.xlu0 %v23, 112
  %v273 = vpop.permute.xlu0 %272
  %274 = vrot.lane.b32.xlu0 %v27, 112
  %v275 = vpop.permute.xlu0 %274
  %276 = vrot.lane.b32.xlu0 %v24, 112
  %v277 = vpop.permute.xlu0 %276
  %278 = vrot.lane.b32.xlu0 %v28, 112
  %v279 = vpop.permute.xlu0 %278
  %vm280 = vcmp.lt.s32.totalorder %v40, 112
  %v281 = vsel %vm280, %v277, %v279
  %v282 = vsel %vm280, %v275, %v277
  %v283 = vsel %vm280, %v273, %v275
  %v284 = vsel %vm280, %v279, %v273
  %s285 = scalar_lea.vmem %s5, 28
  %v286 = vld [vmem:[%s285] sm:$0xf]
  %v288 = vlaneseq
  %v289 = vshrl.u32 %v288, 7
  %v290 = vsub.s32 0, %v289
  %v291 = vrot.slane %v286, %v290
  %v292 = vlaneseq
  %v293 = vshrl.u32 %v292, 7
  %v294 = vsub.s32 1, %v293
  %v295 = vrot.slane %v286, %v294
  %v296 = vlaneseq
  %v297 = vshrl.u32 %v296, 7
  %v298 = vsub.s32 2, %v297
  %v299 = vrot.slane %v286, %v298
  %v300 = vlaneseq
  %v301 = vshrl.u32 %v300, 7
  %v302 = vsub.s32 3, %v301
  %v303 = vrot.slane %v286, %v302
  %v308 = vmul.f32 %v283, %v291
  %v309 = vmul.f32 %v282, %v295
  %v310 = vmul.f32 %v281, %v299
  %v311 = vmul.f32 %v284, %v303
  %312 = vrot.lane.b32.xlu0 %v23, 111
  %v313 = vpop.permute.xlu0 %312
  %314 = vrot.lane.b32.xlu0 %v27, 111
  %v315 = vpop.permute.xlu0 %314
  %316 = vrot.lane.b32.xlu0 %v24, 111
  %v317 = vpop.permute.xlu0 %316
  %318 = vrot.lane.b32.xlu0 %v28, 111
  %v319 = vpop.permute.xlu0 %318
  %vm320 = vcmp.lt.s32.totalorder %v40, 111
  %v321 = vsel %vm320, %v317, %v319
  %v322 = vsel %vm320, %v315, %v317
  %v323 = vsel %vm320, %v313, %v315
  %v324 = vsel %vm320, %v319, %v313
  %s325 = scalar_lea.vmem %s5, 32
  %v326 = vld [vmem:[%s325] sm:$0xf]
  %v328 = vlaneseq
  %v329 = vshrl.u32 %v328, 7
  %v330 = vsub.s32 0, %v329
  %v331 = vrot.slane %v326, %v330
  %v332 = vlaneseq
  %v333 = vshrl.u32 %v332, 7
  %v334 = vsub.s32 1, %v333
  %v335 = vrot.slane %v326, %v334
  %v336 = vlaneseq
  %v337 = vshrl.u32 %v336, 7
  %v338 = vsub.s32 2, %v337
  %v339 = vrot.slane %v326, %v338
  %v340 = vlaneseq
  %v341 = vshrl.u32 %v340, 7
  %v342 = vsub.s32 3, %v341
  %v343 = vrot.slane %v326, %v342
  %v348 = vmul.f32 %v323, %v331
  %v349 = vmul.f32 %v322, %v335
  %v350 = vmul.f32 %v321, %v339
  %v351 = vmul.f32 %v324, %v343
  %v356 = vrot.slane %v108, 4
  %v357 = vrot.slane %v109, 4
  %v358 = vrot.slane %v110, 4
  %v359 = vrot.slane %v111, 4
  %v368 = vrot.slane %v188, 4
  %v369 = vrot.slane %v189, 4
  %v370 = vrot.slane %v190, 4
  %v371 = vrot.slane %v191, 4
  %v380 = vrot.slane %v228, 4
  %v381 = vrot.slane %v229, 4
  %v382 = vrot.slane %v230, 4
  %v383 = vrot.slane %v231, 4
  %v392 = vrot.slane %v308, 4
  %v393 = vrot.slane %v309, 4
  %v394 = vrot.slane %v310, 4
  %v395 = vrot.slane %v311, 4
  %vm400 = vcmask 1043456
  %v401 = vsel %vm400, %v68, %v356
  %v402 = vsel %vm400, %v69, %v357
  %v403 = vsel %vm400, %v70, %v358
  %v404 = vsel %vm400, %v71, %v359
  %v405 = vsel %vm400, %v148, %v368
  %v406 = vsel %vm400, %v149, %v369
  %v407 = vsel %vm400, %v150, %v370
  %v408 = vsel %vm400, %v151, %v371
  %v409 = vsel %vm400, %v23, %v380
  %v410 = vsel %vm400, %v27, %v381
  %v411 = vsel %vm400, %v24, %v382
  %v412 = vsel %vm400, %v28, %v383
  %v413 = vsel %vm400, %v268, %v392
  %v414 = vsel %vm400, %v269, %v393
  %v415 = vsel %vm400, %v270, %v394
  %v416 = vsel %vm400, %v271, %v395
  %v417 = vld [vmem:[%s1] sm:$0xff]
  %v418 = vld [vmem:[%s2] sm:$0xff]
  %420 = vset.pattern.permute.xlu0 0
  %421 = vperm.xlu0 %420, %v418
  %v422 = vpop.permute.xlu0 %421
  %vm424 = vcmask 293888
  %v426 = vsel %vm424, %v417, 0
  %v429 = vsel %vm400, %v348, 0
  %v432 = vsel %vm400, %v349, 0
  %v435 = vsel %vm400, %v350, 0
  %v438 = vsel %vm400, %v351, 0
  %440 = vmatprep.subr.mxu0 %v402
  %441 = vmatpush1.msra.mxu0 %v401
  %442 = vmatprep.subr.mxu0 %v406
  %443 = vmatpush1.msra.mxu0 %v405
  %444 = vmatprep.subr.mxu0 %v410
  %445 = vmatpush1.msra.mxu0 %v409
  %446 = vmatprep.subr.mxu0 %v414
  %447 = vmatpush1.msra.mxu0 %v413
  %448 = vmatprep.subr.mxu0 %v432
  %449 = vmatpush1.msra.mxu0 %v429
  %450 = vmatprep.subr.mxu0 0.0
  %451 = vmatpush1.msra.mxu0 0.0
  %452 = vmatprep.subr.mxu0 0.0
  %453 = vmatpush1.msra.mxu0 0.0
  %454 = vmatprep.subr.mxu0 0.0
  %455 = vmatpush1.msra.mxu0 0.0
  %456 = vmatprep.subr.mxu0 0.0
  %457 = vmatpush1.msra.mxu0 0.0
  %458 = vmatprep.subr.mxu0 0.0
  %459 = vmatpush1.msra.mxu0 0.0
  %460 = vmatprep.subr.mxu0 0.0
  %461 = vmatpush1.msra.mxu0 0.0
  %462 = vmatprep.subr.mxu0 0.0
  %463 = vmatpush1.msra.mxu0 0.0
  %464 = vmatprep.subr.mxu0 0.0
  %465 = vmatpush1.msra.mxu0 0.0
  %466 = vmatprep.subr.mxu0 0.0
  %467 = vmatpush1.msra.mxu0 0.0
  %468 = vmatprep.subr.mxu0 0.0
  %469 = vmatpush1.msra.mxu0 0.0
  %470 = vmatprep.subr.mxu0 0.0
  %471 = vmatpush1.msra.mxu0 0.0
  %472 = vmatprep.subr.mxu0 0.0
  %473 = vmatpush1.msra.mxu0 0.0
  %474 = vmatprep.subr.mxu0 0.0
  %475 = vmatpush1.msra.mxu0 0.0
  %476 = vmatprep.subr.mxu0 0.0
  %477 = vmatpush1.msra.mxu0 0.0
  %478 = vmatprep.subr.mxu0 0.0
  %479 = vmatpush1.msra.mxu0 0.0
  %480 = vmatprep.subr.mxu0 0.0
  %481 = vmatpush1.msra.mxu0 0.0
  %482 = vmatprep.subr.mxu0 0.0
  %483 = vmatpush1.msra.mxu0 0.0
  %484 = vmatprep.subr.mxu0 0.0
  %485 = vmatpush1.msra.mxu0 0.0
  %486 = vmatprep.subr.mxu0 0.0
  %487 = vmatpush1.msra.mxu0 0.0
  %488 = vmatprep.subr.mxu0 0.0
  %489 = vmatpush1.msra.mxu0 0.0
  %490 = vmatprep.subr.mxu0 0.0
  %491 = vmatpush1.msra.mxu0 0.0
  %492 = vmatprep.subr.mxu0 0.0
  %493 = vmatpush1.msra.mxu0 0.0
  %494 = vmatprep.subr.mxu0 0.0
  %495 = vmatpush1.msra.mxu0 0.0
  %496 = vmatprep.subr.mxu0 0.0
  %497 = vmatpush1.msra.mxu0 0.0
  %498 = vmatprep.subr.mxu0 0.0
  %499 = vmatpush1.msra.mxu0 0.0
  %500 = vmatprep.subr.mxu0 0.0
  %501 = vmatpush1.msra.mxu0 0.0
  %502 = vmatprep.subr.mxu0 0.0
  %503 = vmatpush1.msra.mxu0 0.0
  %504 = vmatprep.mubr.f32.mxu0 0.0
  %505 = vmatmul.mubr.f32.gmra.mrb[0].mxu0 %v426
  %v506 = vpop.f32.mrb[0].mxu0
  %v507 = vadd.f32 %v422, %v506
  %v508 = vpop.f32.mrb[0].mxu0
  %v509 = vadd.f32 %v422, %v508
  %510 = vdwg.mxu0
  %511 = vmatprep.subr.mxu0 %v404
  %512 = vmatpush1.msra.mxu0 %v403
  %513 = vmatprep.subr.mxu0 %v408
  %514 = vmatpush1.msra.mxu0 %v407
  %515 = vmatprep.subr.mxu0 %v412
  %516 = vmatpush1.msra.mxu0 %v411
  %517 = vmatprep.subr.mxu0 %v416
  %518 = vmatpush1.msra.mxu0 %v415
  %519 = vmatprep.subr.mxu0 %v438
  %520 = vmatpush1.msra.mxu0 %v435
  %521 = vmatprep.subr.mxu0 0.0
  %522 = vmatpush1.msra.mxu0 0.0
  %523 = vmatprep.subr.mxu0 0.0
  %524 = vmatpush1.msra.mxu0 0.0
  %525 = vmatprep.subr.mxu0 0.0
  %526 = vmatpush1.msra.mxu0 0.0
  %527 = vmatprep.subr.mxu0 0.0
  %528 = vmatpush1.msra.mxu0 0.0
  %529 = vmatprep.subr.mxu0 0.0
  %530 = vmatpush1.msra.mxu0 0.0
  %531 = vmatprep.subr.mxu0 0.0
  %532 = vmatpush1.msra.mxu0 0.0
  %533 = vmatprep.subr.mxu0 0.0
  %534 = vmatpush1.msra.mxu0 0.0
  %535 = vmatprep.subr.mxu0 0.0
  %536 = vmatpush1.msra.mxu0 0.0
  %537 = vmatprep.subr.mxu0 0.0
  %538 = vmatpush1.msra.mxu0 0.0
  %539 = vmatprep.subr.mxu0 0.0
  %540 = vmatpush1.msra.mxu0 0.0
  %541 = vmatprep.subr.mxu0 0.0
  %542 = vmatpush1.msra.mxu0 0.0
  %543 = vmatprep.subr.mxu0 0.0
  %544 = vmatpush1.msra.mxu0 0.0
  %545 = vmatprep.subr.mxu0 0.0
  %546 = vmatpush1.msra.mxu0 0.0
  %547 = vmatprep.subr.mxu0 0.0
  %548 = vmatpush1.msra.mxu0 0.0
  %549 = vmatprep.subr.mxu0 0.0
  %550 = vmatpush1.msra.mxu0 0.0
  %551 = vmatprep.subr.mxu0 0.0
  %552 = vmatpush1.msra.mxu0 0.0
  %553 = vmatprep.subr.mxu0 0.0
  %554 = vmatpush1.msra.mxu0 0.0
  %555 = vmatprep.subr.mxu0 0.0
  %556 = vmatpush1.msra.mxu0 0.0
  %557 = vmatprep.subr.mxu0 0.0
  %558 = vmatpush1.msra.mxu0 0.0
  %559 = vmatprep.subr.mxu0 0.0
  %560 = vmatpush1.msra.mxu0 0.0
  %561 = vmatprep.subr.mxu0 0.0
  %562 = vmatpush1.msra.mxu0 0.0
  %563 = vmatprep.subr.mxu0 0.0
  %564 = vmatpush1.msra.mxu0 0.0
  %565 = vmatprep.subr.mxu0 0.0
  %566 = vmatpush1.msra.mxu0 0.0
  %567 = vmatprep.subr.mxu0 0.0
  %568 = vmatpush1.msra.mxu0 0.0
  %569 = vmatprep.subr.mxu0 0.0
  %570 = vmatpush1.msra.mxu0 0.0
  %571 = vmatprep.subr.mxu0 0.0
  %572 = vmatpush1.msra.mxu0 0.0
  %573 = vmatprep.subr.mxu0 0.0
  %574 = vmatpush1.msra.mxu0 0.0
  %575 = vmatprep.mubr.f32.mxu0 0.0
  %576 = vmatmul.mubr.f32.gmra.mrb[0].mxu0 %v426
  %v577 = vpop.f32.mrb[0].mxu0
  %v578 = vadd.f32 %v422, %v577
  %v579 = vpop.f32.mrb[0].mxu0
  %v580 = vadd.f32 %v422, %v579
  %581 = vdwg.mxu0
  %vm582 = vcmp.gt.f32.partialorder %v507, 0.0
  %vm583 = vcmp.gt.f32.partialorder %v509, 0.0
  %vm584 = vcmp.gt.f32.partialorder %v578, 0.0
  %vm585 = vcmp.gt.f32.partialorder %v580, 0.0
  %v586 = vmul.f32 %v507, 0.01
  %v587 = vmul.f32 %v509, 0.01
  %v588 = vmul.f32 %v578, 0.01
  %v589 = vmul.f32 %v580, 0.01
  %v590 = vsel %vm582, %v507, %v586
  %v591 = vsel %vm583, %v509, %v587
  %v592 = vsel %vm584, %v578, %v588
  %v593 = vsel %vm585, %v580, %v589
  %594 = vrot.lane.b32.xlu0 %v590, 17
  %v595 = vpop.permute.xlu0 %594
  %596 = vrot.lane.b32.xlu0 %v591, 17
  %v597 = vpop.permute.xlu0 %596
  %598 = vrot.lane.b32.xlu0 %v592, 17
  %v599 = vpop.permute.xlu0 %598
  %600 = vrot.lane.b32.xlu0 %v593, 17
  %v601 = vpop.permute.xlu0 %600
  %v602 = vsel %vm41, %v599, %v601
  %v603 = vsel %vm41, %v597, %v599
  %v604 = vsel %vm41, %v595, %v597
  %v605 = vsel %vm41, %v601, %v595
  %v606 = vmul.f32 %v605, %v51
  %v607 = vmul.f32 %v604, %v55
  %v608 = vmul.f32 %v603, %v59
  %v609 = vmul.f32 %v602, %v63
  %610 = vrot.lane.b32.xlu0 %v590, 16
  %v611 = vpop.permute.xlu0 %610
  %612 = vrot.lane.b32.xlu0 %v591, 16
  %v613 = vpop.permute.xlu0 %612
  %614 = vrot.lane.b32.xlu0 %v592, 16
  %v615 = vpop.permute.xlu0 %614
  %616 = vrot.lane.b32.xlu0 %v593, 16
  %v617 = vpop.permute.xlu0 %616
  %v618 = vsel %vm80, %v615, %v617
  %v619 = vsel %vm80, %v613, %v615
  %v620 = vsel %vm80, %v611, %v613
  %v621 = vsel %vm80, %v617, %v611
  %v622 = vmul.f32 %v621, %v91
  %v623 = vmul.f32 %v620, %v95
  %v624 = vmul.f32 %v619, %v99
  %v625 = vmul.f32 %v618, %v103
  %626 = vrot.lane.b32.xlu0 %v590, 15
  %v627 = vpop.permute.xlu0 %626
  %628 = vrot.lane.b32.xlu0 %v591, 15
  %v629 = vpop.permute.xlu0 %628
  %630 = vrot.lane.b32.xlu0 %v592, 15
  %v631 = vpop.permute.xlu0 %630
  %632 = vrot.lane.b32.xlu0 %v593, 15
  %v633 = vpop.permute.xlu0 %632
  %v634 = vsel %vm120, %v631, %v633
  %v635 = vsel %vm120, %v629, %v631
  %v636 = vsel %vm120, %v627, %v629
  %v637 = vsel %vm120, %v633, %v627
  %v638 = vmul.f32 %v637, %v131
  %v639 = vmul.f32 %v636, %v135
  %v640 = vmul.f32 %v635, %v139
  %v641 = vmul.f32 %v634, %v143
  %642 = vrot.lane.b32.xlu0 %v590, 1
  %v643 = vpop.permute.xlu0 %642
  %644 = vrot.lane.b32.xlu0 %v591, 1
  %v645 = vpop.permute.xlu0 %644
  %646 = vrot.lane.b32.xlu0 %v592, 1
  %v647 = vpop.permute.xlu0 %646
  %648 = vrot.lane.b32.xlu0 %v593, 1
  %v649 = vpop.permute.xlu0 %648
  %v650 = vsel %vm160, %v647, %v649
  %v651 = vsel %vm160, %v645, %v647
  %v652 = vsel %vm160, %v643, %v645
  %v653 = vsel %vm160, %v649, %v643
  %v654 = vmul.f32 %v653, %v171
  %v655 = vmul.f32 %v652, %v175
  %v656 = vmul.f32 %v651, %v179
  %v657 = vmul.f32 %v650, %v183
  %658 = vrot.lane.b32.xlu0 %v590, 127
  %v659 = vpop.permute.xlu0 %658
  %660 = vrot.lane.b32.xlu0 %v591, 127
  %v661 = vpop.permute.xlu0 %660
  %662 = vrot.lane.b32.xlu0 %v592, 127
  %v663 = vpop.permute.xlu0 %662
  %664 = vrot.lane.b32.xlu0 %v593, 127
  %v665 = vpop.permute.xlu0 %664
  %v666 = vsel %vm200, %v663, %v665
  %v667 = vsel %vm200, %v661, %v663
  %v668 = vsel %vm200, %v659, %v661
  %v669 = vsel %vm200, %v665, %v659
  %v670 = vmul.f32 %v668, %v211
  %v671 = vmul.f32 %v667, %v215
  %v672 = vmul.f32 %v666, %v219
  %v673 = vmul.f32 %v669, %v223
  %674 = vrot.lane.b32.xlu0 %v590, 113
  %v675 = vpop.permute.xlu0 %674
  %676 = vrot.lane.b32.xlu0 %v591, 113
  %v677 = vpop.permute.xlu0 %676
  %678 = vrot.lane.b32.xlu0 %v592, 113
  %v679 = vpop.permute.xlu0 %678
  %680 = vrot.lane.b32.xlu0 %v593, 113
  %v681 = vpop.permute.xlu0 %680
  %v682 = vsel %vm240, %v679, %v681
  %v683 = vsel %vm240, %v677, %v679
  %v684 = vsel %vm240, %v675, %v677
  %v685 = vsel %vm240, %v681, %v675
  %v686 = vmul.f32 %v684, %v251
  %v687 = vmul.f32 %v683, %v255
  %v688 = vmul.f32 %v682, %v259
  %v689 = vmul.f32 %v685, %v263
  %690 = vrot.lane.b32.xlu0 %v590, 112
  %v691 = vpop.permute.xlu0 %690
  %692 = vrot.lane.b32.xlu0 %v591, 112
  %v693 = vpop.permute.xlu0 %692
  %694 = vrot.lane.b32.xlu0 %v592, 112
  %v695 = vpop.permute.xlu0 %694
  %696 = vrot.lane.b32.xlu0 %v593, 112
  %v697 = vpop.permute.xlu0 %696
  %v698 = vsel %vm280, %v695, %v697
  %v699 = vsel %vm280, %v693, %v695
  %v700 = vsel %vm280, %v691, %v693
  %v701 = vsel %vm280, %v697, %v691
  %v702 = vmul.f32 %v700, %v291
  %v703 = vmul.f32 %v699, %v295
  %v704 = vmul.f32 %v698, %v299
  %v705 = vmul.f32 %v701, %v303
  %706 = vrot.lane.b32.xlu0 %v590, 111
  %v707 = vpop.permute.xlu0 %706
  %708 = vrot.lane.b32.xlu0 %v591, 111
  %v709 = vpop.permute.xlu0 %708
  %710 = vrot.lane.b32.xlu0 %v592, 111
  %v711 = vpop.permute.xlu0 %710
  %712 = vrot.lane.b32.xlu0 %v593, 111
  %v713 = vpop.permute.xlu0 %712
  %v714 = vsel %vm320, %v711, %v713
  %v715 = vsel %vm320, %v709, %v711
  %v716 = vsel %vm320, %v707, %v709
  %v717 = vsel %vm320, %v713, %v707
  %v718 = vmul.f32 %v716, %v331
  %v719 = vmul.f32 %v715, %v335
  %v720 = vmul.f32 %v714, %v339
  %v721 = vmul.f32 %v717, %v343
  %v722 = vld [vmem:[%s3] sm:$0xff]
  %v723 = vld [vmem:[%s4] sm:$0xff]
  %725 = vset.pattern.permute.xlu0 0
  %726 = vperm.xlu0 %725, %v723
  %v727 = vpop.permute.xlu0 %726
  %vm729 = vcmask 588800
  %v731 = vsel %vm729, %v722, 0
  %733 = vmatprep.subr.mxu0 %v607
  %734 = vmatpush1.msra.mxu0 %v606
  %735 = vmatprep.subr.mxu0 %v623
  %736 = vmatpush1.msra.mxu0 %v622
  %737 = vmatprep.subr.mxu0 %v639
  %738 = vmatpush1.msra.mxu0 %v638
  %739 = vmatprep.subr.mxu0 %v655
  %740 = vmatpush1.msra.mxu0 %v654
  %741 = vmatprep.subr.mxu0 %v591
  %742 = vmatpush1.msra.mxu0 %v590
  %743 = vmatprep.subr.mxu0 %v671
  %744 = vmatpush1.msra.mxu0 %v670
  %745 = vmatprep.subr.mxu0 %v687
  %746 = vmatpush1.msra.mxu0 %v686
  %747 = vmatprep.subr.mxu0 %v703
  %748 = vmatpush1.msra.mxu0 %v702
  %749 = vmatprep.subr.mxu0 %v719
  %750 = vmatpush1.msra.mxu0 %v718
  %751 = vmatprep.subr.mxu0 0.0
  %752 = vmatpush1.msra.mxu0 0.0
  %753 = vmatprep.subr.mxu0 0.0
  %754 = vmatpush1.msra.mxu0 0.0
  %755 = vmatprep.subr.mxu0 0.0
  %756 = vmatpush1.msra.mxu0 0.0
  %757 = vmatprep.subr.mxu0 0.0
  %758 = vmatpush1.msra.mxu0 0.0
  %759 = vmatprep.subr.mxu0 0.0
  %760 = vmatpush1.msra.mxu0 0.0
  %761 = vmatprep.subr.mxu0 0.0
  %762 = vmatpush1.msra.mxu0 0.0
  %763 = vmatprep.subr.mxu0 0.0
  %764 = vmatpush1.msra.mxu0 0.0
  %765 = vmatprep.subr.mxu0 0.0
  %766 = vmatpush1.msra.mxu0 0.0
  %767 = vmatprep.subr.mxu0 0.0
  %768 = vmatpush1.msra.mxu0 0.0
  %769 = vmatprep.subr.mxu0 0.0
  %770 = vmatpush1.msra.mxu0 0.0
  %771 = vmatprep.subr.mxu0 0.0
  %772 = vmatpush1.msra.mxu0 0.0
  %773 = vmatprep.subr.mxu0 0.0
  %774 = vmatpush1.msra.mxu0 0.0
  %775 = vmatprep.subr.mxu0 0.0
  %776 = vmatpush1.msra.mxu0 0.0
  %777 = vmatprep.subr.mxu0 0.0
  %778 = vmatpush1.msra.mxu0 0.0
  %779 = vmatprep.subr.mxu0 0.0
  %780 = vmatpush1.msra.mxu0 0.0
  %781 = vmatprep.subr.mxu0 0.0
  %782 = vmatpush1.msra.mxu0 0.0
  %783 = vmatprep.subr.mxu0 0.0
  %784 = vmatpush1.msra.mxu0 0.0
  %785 = vmatprep.subr.mxu0 0.0
  %786 = vmatpush1.msra.mxu0 0.0
  %787 = vmatprep.subr.mxu0 0.0
  %788 = vmatpush1.msra.mxu0 0.0
  %789 = vmatprep.subr.mxu0 0.0
  %790 = vmatpush1.msra.mxu0 0.0
  %791 = vmatprep.subr.mxu0 0.0
  %792 = vmatpush1.msra.mxu0 0.0
  %793 = vmatprep.subr.mxu0 0.0
  %794 = vmatpush1.msra.mxu0 0.0
  %795 = vmatprep.subr.mxu0 0.0
  %796 = vmatpush1.msra.mxu0 0.0
  %797 = vmatprep.mubr.f32.mxu0 0.0
  %798 = vmatmul.mubr.f32.gmra.mrb[0].mxu0 %v731
  %v799 = vpop.f32.mrb[0].mxu0
  %v800 = vadd.f32 %v727, %v799
  %v801 = vpop.f32.mrb[0].mxu0
  %v802 = vadd.f32 %v727, %v801
  %803 = vdwg.mxu0
  %804 = vmatprep.subr.mxu0 %v609
  %805 = vmatpush1.msra.mxu0 %v608
  %806 = vmatprep.subr.mxu0 %v625
  %807 = vmatpush1.msra.mxu0 %v624
  %808 = vmatprep.subr.mxu0 %v641
  %809 = vmatpush1.msra.mxu0 %v640
  %810 = vmatprep.subr.mxu0 %v657
  %811 = vmatpush1.msra.mxu0 %v656
  %812 = vmatprep.subr.mxu0 %v593
  %813 = vmatpush1.msra.mxu0 %v592
  %814 = vmatprep.subr.mxu0 %v673
  %815 = vmatpush1.msra.mxu0 %v672
  %816 = vmatprep.subr.mxu0 %v689
  %817 = vmatpush1.msra.mxu0 %v688
  %818 = vmatprep.subr.mxu0 %v705
  %819 = vmatpush1.msra.mxu0 %v704
  %820 = vmatprep.subr.mxu0 %v721
  %821 = vmatpush1.msra.mxu0 %v720
  %822 = vmatprep.subr.mxu0 0.0
  %823 = vmatpush1.msra.mxu0 0.0
  %824 = vmatprep.subr.mxu0 0.0
  %825 = vmatpush1.msra.mxu0 0.0
  %826 = vmatprep.subr.mxu0 0.0
  %827 = vmatpush1.msra.mxu0 0.0
  %828 = vmatprep.subr.mxu0 0.0
  %829 = vmatpush1.msra.mxu0 0.0
  %830 = vmatprep.subr.mxu0 0.0
  %831 = vmatpush1.msra.mxu0 0.0
  %832 = vmatprep.subr.mxu0 0.0
  %833 = vmatpush1.msra.mxu0 0.0
  %834 = vmatprep.subr.mxu0 0.0
  %835 = vmatpush1.msra.mxu0 0.0
  %836 = vmatprep.subr.mxu0 0.0
  %837 = vmatpush1.msra.mxu0 0.0
  %838 = vmatprep.subr.mxu0 0.0
  %839 = vmatpush1.msra.mxu0 0.0
  %840 = vmatprep.subr.mxu0 0.0
  %841 = vmatpush1.msra.mxu0 0.0
  %842 = vmatprep.subr.mxu0 0.0
  %843 = vmatpush1.msra.mxu0 0.0
  %844 = vmatprep.subr.mxu0 0.0
  %845 = vmatpush1.msra.mxu0 0.0
  %846 = vmatprep.subr.mxu0 0.0
  %847 = vmatpush1.msra.mxu0 0.0
  %848 = vmatprep.subr.mxu0 0.0
  %849 = vmatpush1.msra.mxu0 0.0
  %850 = vmatprep.subr.mxu0 0.0
  %851 = vmatpush1.msra.mxu0 0.0
  %852 = vmatprep.subr.mxu0 0.0
  %853 = vmatpush1.msra.mxu0 0.0
  %854 = vmatprep.subr.mxu0 0.0
  %855 = vmatpush1.msra.mxu0 0.0
  %856 = vmatprep.subr.mxu0 0.0
  %857 = vmatpush1.msra.mxu0 0.0
  %858 = vmatprep.subr.mxu0 0.0
  %859 = vmatpush1.msra.mxu0 0.0
  %860 = vmatprep.subr.mxu0 0.0
  %861 = vmatpush1.msra.mxu0 0.0
  %862 = vmatprep.subr.mxu0 0.0
  %863 = vmatpush1.msra.mxu0 0.0
  %864 = vmatprep.subr.mxu0 0.0
  %865 = vmatpush1.msra.mxu0 0.0
  %866 = vmatprep.subr.mxu0 0.0
  %867 = vmatpush1.msra.mxu0 0.0
  %868 = vmatprep.mubr.f32.mxu0 0.0
  %869 = vmatmul.mubr.f32.gmra.mrb[0].mxu0 %v731
  %v870 = vpop.f32.mrb[0].mxu0
  %v871 = vadd.f32 %v727, %v870
  %v872 = vpop.f32.mrb[0].mxu0
  %v873 = vadd.f32 %v727, %v872
  %874 = vdwg.mxu0
  %vm875 = vcmp.gt.f32.partialorder %v800, 0.0
  %vm876 = vcmp.gt.f32.partialorder %v802, 0.0
  %vm877 = vcmp.gt.f32.partialorder %v871, 0.0
  %vm878 = vcmp.gt.f32.partialorder %v873, 0.0
  %v879 = vmul.f32 %v800, 0.01
  %v880 = vmul.f32 %v802, 0.01
  %v881 = vmul.f32 %v871, 0.01
  %v882 = vmul.f32 %v873, 0.01
  %v883 = vsel %vm875, %v800, %v879
  %v884 = vsel %vm876, %v802, %v880
  %v885 = vsel %vm877, %v871, %v881
  %v886 = vsel %vm878, %v873, %v882
  %887 = vst [vmem:[%s6] sm:$0xff] %v883
  %888 = vst [vmem:[%s6 + $0x8] sm:$0xff] %v884
  %889 = vst [vmem:[%s6 + $0x10] sm:$0xff] %v885
  %890 = vst [vmem:[%s6 + $0x18] sm:$0xff] %v886
  // Predicated region
  $region26: #{conv_module_forward.1} parent=0 // pred_check
    _
  $region27: #{conv_module_forward.1} parent=0 // pred_check_branch
    %892 = sbr.rel (0) target = $region29
  $region28: #{conv_module_forward.1} parent=0 // pred_region
    _
  $region29: #{conv_module_forward.1} parent=0 // pred_fallthru
    _
  // Predicated region
  $region30: #{conv_module_forward.1} parent=0 // pred_check
    _
  $region31: #{conv_module_forward.1} parent=0 // pred_check_branch
    %894 = sbr.rel (0) target = $region33
  $region32: #{conv_module_forward.1} parent=0 // pred_region
    _
  $region33: #{conv_module_forward.1} parent=0 // pred_fallthru
    _

</llo_original>
